<compile_context>
chip_gen: v7x
topology: tpu7x:2x2x1
jax: 0.10.0
libtpu: 0.0.40
codegen_flags: <defaults>
</compile_context>

<pallas_src>
import functools

import jax
import jax.numpy as jnp
from jax.experimental import pallas as pl
from jax.experimental.pallas import tpu as pltpu

LANES = 128
SUBLANES = 8
MAX_BLOCK_ROWS = 4096              # (4096, 128) f32 = 2 MiB per input buffer
NUM_PARTITIONS = 2                 # v7x: 2 TensorCores per chip
VMEM_LIMIT_BYTES = 32 * 1024 * 1024


def _ceil_to(x, m):
    return -(-x // m) * m


def _msle_kernel(pred_ref, act_ref, out_ref, *, block_rows, blocks_per_part,
                 total_blocks, rows_valid, padded_grid, needs_row_mask):
    part = pl.program_id(0)
    step = pl.program_id(1)
    blk = part * blocks_per_part + step          # global block index (scalar)

    @pl.when(step == 0)
    def _():
        out_ref[...] = jnp.zeros_like(out_ref)

    x = pred_ref[...].astype(jnp.float32)
    y = act_ref[...].astype(jnp.float32)
    d = jnp.log1p(x) - jnp.log1p(y)              # log(v + 1)
    dd = d * d

    def accumulate(vals):
        # Pure-VPU partial reduction into one (8, 128) vreg-shaped accumulator;
        # the single scalar reduce + divide happens once in the wrapper.
        psum = vals.reshape(block_rows // SUBLANES, SUBLANES, LANES).sum(axis=0)
        out_ref[...] += psum[None]

    if not (padded_grid or needs_row_mask):
        # Common case: every block is full and real -> unmasked fast path.
        accumulate(dd)
    else:
        last_real = total_blocks - 1
        if needs_row_mask:
            plain = blk != last_real
            if padded_grid:
                plain = jnp.logical_and(plain, blk < total_blocks)

            @pl.when(plain)
            def _():
                accumulate(dd)

            @pl.when(blk == last_real)
            def _():
                # Final block overhangs the (rows, 128) slab; Pallas leaves the
                # out-of-range rows of the VMEM buffer unspecified, so zero
                # their contribution.  int32 row index is fine below ~2^31 rows
                # (~2.7e11 elements).
                row0 = blk * block_rows
                row_idx = row0 + jax.lax.broadcasted_iota(
                    jnp.int32, (block_rows, LANES), 0)
                accumulate(jnp.where(row_idx < rows_valid, dd, 0.0))
        else:
            # Grid padded (odd block count split across 2 cores) but no
            # overhang: skip only the duplicated trailing step.
            @pl.when(blk < total_blocks)
            def _():
                accumulate(dd)


def msle_loss(pred, actual, *, max_block_rows=MAX_BLOCK_ROWS):
    assert pred.shape == actual.shape, "pred/actual must have identical shapes"
    assert max_block_rows % SUBLANES == 0
    n = pred.size
    out_dtype = pred.dtype
    if n == 0:
        # torch mean over an empty tensor -> nan
        return jnp.asarray(jnp.nan, dtype=out_dtype)

    # Lane-dense (rows, 128) slab.  For n % 128 == 0 this is a free reshape
    # (no HBM copy); otherwise pad only the final partial 128-lane row.
    rows = -(-n // LANES)
    pad = rows * LANES - n
    p = pred.reshape(-1)
    a = actual.reshape(-1)
    if pad:
        p = jnp.pad(p, (0, pad))
        a = jnp.pad(a, (0, pad))
    p = p.reshape(rows, LANES)
    a = a.reshape(rows, LANES)

    # Block shape must stay (8, 128)-aligned; the slab itself need not be.
    block_rows = min(max_block_rows, _ceil_to(rows, SUBLANES))
    total_blocks = -(-rows // block_rows)

    # Leading "parallel" axis so v7x's 2 TensorCores can shard the reduction
    # (harmless on 1-TC v5e/v6e).  Odd counts round up; the duplicated step is
    # skipped inside the kernel.
    parts = NUM_PARTITIONS if total_blocks >= NUM_PARTITIONS else 1
    blocks_per_part = -(-total_blocks // parts)
    padded_grid = parts * blocks_per_part != total_blocks
    needs_row_mask = total_blocks * block_rows != rows

    kernel = functools.partial(
        _msle_kernel,
        block_rows=block_rows,
        blocks_per_part=blocks_per_part,
        total_blocks=total_blocks,
        rows_valid=rows,
        padded_grid=padded_grid,
        needs_row_mask=needs_row_mask,
    )

    def in_map(c, i):
        # `% total_blocks` keeps the (at most one) duplicated step pointing at a
        # valid block so its DMA stays in bounds; its accumulate is skipped.
        return ((c * blocks_per_part + i) % total_blocks, 0)

    bytes_in = n * (jnp.dtype(pred.dtype).itemsize + jnp.dtype(actual.dtype).itemsize)
    cost = pl.CostEstimate(flops=3 * n, transcendentals=2 * n,
                           bytes_accessed=bytes_in)

    partials = pl.pallas_call(
        kernel,
        out_shape=jax.ShapeDtypeStruct((parts, SUBLANES, LANES), jnp.float32),
        grid_spec=pltpu.PrefetchScalarGridSpec(
            num_scalar_prefetch=0,
            grid=(parts, blocks_per_part),
            in_specs=[
                pl.BlockSpec((block_rows, LANES), in_map),
                pl.BlockSpec((block_rows, LANES), in_map),
            ],
            out_specs=pl.BlockSpec((1, SUBLANES, LANES), lambda c, i: (c, 0, 0)),
        ),
        compiler_params=pltpu.CompilerParams(
            dimension_semantics=("parallel", "arbitrary"),
            vmem_limit_bytes=VMEM_LIMIT_BYTES,
        ),
        cost_estimate=cost,
    )(p, a)

    loss = partials.sum() / jnp.float32(n)
    return loss.astype(out_dtype)


if __name__ == "__main__":
    key = jax.random.PRNGKey(0)
    k1, k2, k3, k4 = jax.random.split(key, 4)

    # Small NCHW-like shape; values non-negative, matching MSLE's log(x + 1).
    shape = (2, 4, 16, 16)
    pred = jax.random.uniform(k1, shape, dtype=jnp.float32, minval=0.0, maxval=10.0)
    actual = jax.random.uniform(k2, shape, dtype=jnp.float32, minval=0.0, maxval=10.0)

    loss = msle_loss(pred, actual)
    jax.block_until_ready(loss)
    ref = jnp.mean((jnp.log1p(pred) - jnp.log1p(actual)) ** 2)
    assert jnp.allclose(loss, ref, rtol=1e-5, atol=1e-6), (loss, ref)

    # Ragged (n % 128 != 0) case: exercises the <128-element lane-tail pad.
    shape2 = (3, 1000, 100)
    pred2 = jax.random.uniform(k3, shape2, dtype=jnp.float32, minval=0.0, maxval=10.0)
    actual2 = jax.random.uniform(k4, shape2, dtype=jnp.float32, minval=0.0, maxval=10.0)

    loss2 = msle_loss(pred2, actual2)
    jax.block_until_ready(loss2)
    ref2 = jnp.mean((jnp.log1p(pred2) - jnp.log1p(actual2)) ** 2)
    assert jnp.allclose(loss2, ref2, rtol=1e-5, atol=1e-6), (loss2, ref2)

    # Small-block config on the same data: exercises multi-block streaming, an
    # odd block count split across the 2-partition parallel axis (padded grid
    # with the duplicate step skipped), and last-block overhang masking.
    loss3 = msle_loss(pred2, actual2, max_block_rows=512)
    jax.block_until_ready(loss3)
    assert jnp.allclose(loss3, ref2, rtol=1e-5, atol=1e-6), (loss3, ref2)

    print("KERNEL_OK")
</pallas_src>

<mosaic_0001>
module attributes {stable_mosaic.version = 11 : i64} {
  func.func @_msle_kernel(%arg0: i32, %arg1: i32, %arg2: memref<16x128xf32, #tpu.memory_space<vmem>>, %arg3: memref<16x128xf32, #tpu.memory_space<vmem>>, %arg4: memref<1x8x128xf32, #tpu.memory_space<vmem>>) attributes {dimension_semantics = [#tpu.dimension_semantics<parallel>, #tpu.dimension_semantics<arbitrary>], iteration_bounds = array<i64: 1, 1>, scalar_prefetch = 0 : i64, scratch_operands = 0 : i64, tpu.core_type = #tpu.core_type<tc>, window_params = [{transform_indices = @transform_0, window_bounds = array<i64: 16, 128>}, {transform_indices = @transform_1, window_bounds = array<i64: 16, 128>}, {transform_indices = @transform_2, window_bounds = array<i64: 1, 8, 128>}]} {
    %c0_i32 = arith.constant 0 : i32
    %0 = arith.cmpi eq, %arg1, %c0_i32 : i32
    %1 = arith.extui %0 : i1 to i32
    %c0_i32_0 = arith.constant 0 : i32
    %2 = arith.cmpi ne, %1, %c0_i32_0 : i32
    scf.if %2 {
      %cst_10 = arith.constant 0.000000e+00 : f32
      %15 = vector.broadcast %cst_10 : f32 to vector<1x8x128xf32>
      %c0_11 = arith.constant 0 : index
      %c0_12 = arith.constant 0 : index
      %c0_13 = arith.constant 0 : index
      %16 = vector.load %arg4[%c0_11, %c0_12, %c0_13] : memref<1x8x128xf32, #tpu.memory_space<vmem>>, vector<1x8x128xf32>
      tpu.vector_store %arg4[%c0_11, %c0_12, %c0_13], %15 {strides = array<i32>} : memref<1x8x128xf32, #tpu.memory_space<vmem>>, vector<1x8x128xf32>,
    } else {
    }
    %c0 = arith.constant 0 : index
    %c0_1 = arith.constant 0 : index
    %3 = vector.load %arg2[%c0, %c0_1] : memref<16x128xf32, #tpu.memory_space<vmem>>, vector<16x128xf32>
    %c0_2 = arith.constant 0 : index
    %c0_3 = arith.constant 0 : index
    %4 = vector.load %arg3[%c0_2, %c0_3] : memref<16x128xf32, #tpu.memory_space<vmem>>, vector<16x128xf32>
    %5 = math.log1p %3 : vector<16x128xf32>
    %6 = math.log1p %4 : vector<16x128xf32>
    %7 = arith.subf %5, %6 : vector<16x128xf32>
    %8 = arith.mulf %7, %7 : vector<16x128xf32>
    %9 = vector.shape_cast %8 : vector<16x128xf32> to vector<2x8x128xf32>
    %cst = arith.constant dense<0.000000e+00> : vector<8x128xf32>
    %10 = vector.multi_reduction <add>, %9, %cst [0] : vector<2x8x128xf32> to vector<8x128xf32>
    %c0_4 = arith.constant 0 : index
    %c0_5 = arith.constant 0 : index
    %c0_6 = arith.constant 0 : index
    %11 = vector.load %arg4[%c0_4, %c0_5, %c0_6] : memref<1x8x128xf32, #tpu.memory_space<vmem>>, vector<1x8x128xf32>
    %12 = vector.shape_cast %10 : vector<8x128xf32> to vector<1x8x128xf32>
    %13 = arith.addf %11, %12 : vector<1x8x128xf32>
    %c0_7 = arith.constant 0 : index
    %c0_8 = arith.constant 0 : index
    %c0_9 = arith.constant 0 : index
    %14 = vector.load %arg4[%c0_7, %c0_8, %c0_9] : memref<1x8x128xf32, #tpu.memory_space<vmem>>, vector<1x8x128xf32>
    tpu.vector_store %arg4[%c0_7, %c0_8, %c0_9], %13 {strides = array<i32>} : memref<1x8x128xf32, #tpu.memory_space<vmem>>, vector<1x8x128xf32>,
    return
  }
  func.func @transform_0(%arg0: i32, %arg1: i32) -> (i32, i32) {
    %c1_i32 = arith.constant 1 : i32
    %0 = arith.muli %arg0, %c1_i32 : i32
    %1 = arith.addi %0, %arg1 : i32
    %c1_i32_0 = arith.constant 1 : i32
    %c0_i32 = arith.constant 0 : i32
    %2 = arith.cmpi eq, %c1_i32_0, %c0_i32 : i32
    %c1_i32_1 = arith.constant 1 : i32
    %3 = arith.select %2, %c1_i32_1, %c1_i32_0 : i32
    %4 = arith.remsi %1, %3 : i32
    %c0_i32_2 = arith.constant 0 : i32
    %5 = arith.cmpi ne, %4, %c0_i32_2 : i32
    %c0_i32_3 = arith.constant 0 : i32
    %6 = arith.cmpi slt, %4, %c0_i32_3 : i32
    %c0_i32_4 = arith.constant 0 : i32
    %7 = arith.cmpi slt, %3, %c0_i32_4 : i32
    %8 = arith.xori %6, %7 : i1
    %9 = arith.andi %8, %5 : i1
    %10 = arith.addi %4, %3 : i32
    %11 = arith.select %9, %10, %4 : i32
    %c0_i32_5 = arith.constant 0 : i32
    %c0_i32_6 = arith.constant 0 : i32
    return %11, %c0_i32_5 : i32, i32
  }
  func.func @transform_1(%arg0: i32, %arg1: i32) -> (i32, i32) {
    %c1_i32 = arith.constant 1 : i32
    %0 = arith.muli %arg0, %c1_i32 : i32
    %1 = arith.addi %0, %arg1 : i32
    %c1_i32_0 = arith.constant 1 : i32
    %c0_i32 = arith.constant 0 : i32
    %2 = arith.cmpi eq, %c1_i32_0, %c0_i32 : i32
    %c1_i32_1 = arith.constant 1 : i32
    %3 = arith.select %2, %c1_i32_1, %c1_i32_0 : i32
    %4 = arith.remsi %1, %3 : i32
    %c0_i32_2 = arith.constant 0 : i32
    %5 = arith.cmpi ne, %4, %c0_i32_2 : i32
    %c0_i32_3 = arith.constant 0 : i32
    %6 = arith.cmpi slt, %4, %c0_i32_3 : i32
    %c0_i32_4 = arith.constant 0 : i32
    %7 = arith.cmpi slt, %3, %c0_i32_4 : i32
    %8 = arith.xori %6, %7 : i1
    %9 = arith.andi %8, %5 : i1
    %10 = arith.addi %4, %3 : i32
    %11 = arith.select %9, %10, %4 : i32
    %c0_i32_5 = arith.constant 0 : i32
    %c0_i32_6 = arith.constant 0 : i32
    return %11, %c0_i32_5 : i32, i32
  }
  func.func @transform_2(%arg0: i32, %arg1: i32) -> (i32, i32, i32) {
    %c0_i32 = arith.constant 0 : i32
    %c0_i32_0 = arith.constant 0 : i32
    %c0_i32_1 = arith.constant 0 : i32
    return %arg0, %c0_i32, %c0_i32_0 : i32, i32, i32
  }
}

</mosaic_0001>

<llo_original>
// kernel: tpu_custom_call.1
$region0: #{tpu_custom_call.1}
  #allocation0 [shape = 'u32[]', space=smem, size = 0x4, offset = 0x4, fixed_abs, tag = 'smem constant byte address 0x4 - core index']
  #allocation1 [shape = 'u32[144,128]{1,0:T(1,128)}', space=vmem, size = 0x12000, scoped, tag = 'internal scratch']
  %s0 = inlined_call_operand.hbm [shape: f32[16,128], index: 0, kind: input, shape index: {}]
  %s1 = inlined_call_operand.hbm [shape: f32[16,128], index: 1, kind: input, shape index: {}]
  %s2 = inlined_call_operand.hbm [shape: f32[1,8,128], index: 2, kind: output, shape index: {}]
  %s3 = sld [smem:[#allocation0]]
  $region30: #{tpu_custom_call.1} parent=0
    _
  %s5 = ssub.s32 1, %s3
  %s6 = scalar_select 0, %s5, %s3
  $region1: #{tpu_custom_call.1} parent=0
    #allocation2 [shape = 'u8[8192]{0}', space=vmem, size = 0x2000, scoped, tag = 'input window, operand 0, single buffered']
    #allocation3 [shape = 's32[1]{0}', space=sflag, size = 0x4, scoped, tag = 'scoped memory for tpu_custom_call.1']
    #allocation4 [shape = 's32[1]{0}', space=sflag, size = 0x4, scoped, tag = 'scoped memory for tpu_custom_call.1']
    #allocation5 [shape = 'u8[8192]{0}', space=vmem, size = 0x2000, scoped, tag = 'input window, operand 1, single buffered']
    #allocation6 [shape = 's32[1]{0}', space=sflag, size = 0x4, scoped, tag = 'scoped memory for tpu_custom_call.1']
    #allocation7 [shape = 'u8[4096]{0}', space=vmem, size = 0x1000, scoped, tag = 'output window, operand 0, single buffered']
    %7 = vsyncpa [#allocation3], 0
    %8 = vsyncpa [#allocation6], 0
    %9 = vsyncpa [#allocation4], 0
    // Predicated region
    $region2: #{tpu_custom_call.1} parent=1 // pred_check
      _
    $region3: #{tpu_custom_call.1} parent=1 // pred_check_branch
      %11 = sbr.rel (0) target = $region5
    $region4: #{tpu_custom_call.1} parent=1 // pred_region
      %s13 = ssub.s32 256, 256
      %14 = vsyncadd [#allocation3], %s13
      %s15 = sshll.u32 [#allocation2], 4
      %s16 = int_to_ptr.vmem [resolvable:$true] %s15
      %21 = dma.hbm_to_vmem [thread:$0]  %s0, 256, %s16, [#allocation3], 128, 128, 8
    $region5: #{tpu_custom_call.1} parent=1 // pred_fallthru
      _
    // Predicated region
    $region6: #{tpu_custom_call.1} parent=1 // pred_check
      _
    $region7: #{tpu_custom_call.1} parent=1 // pred_check_branch
      %23 = sbr.rel (0) target = $region9
    $region8: #{tpu_custom_call.1} parent=1 // pred_region
      %s25 = ssub.s32 256, 256
      %26 = vsyncadd [#allocation6], %s25
      %s27 = sshll.u32 [#allocation5], 4
      %s28 = int_to_ptr.vmem [resolvable:$true] %s27
      %33 = dma.hbm_to_vmem [thread:$0]  %s1, 256, %s28, [#allocation6], 128, 128, 8
    $region9: #{tpu_custom_call.1} parent=1 // pred_fallthru
      _
    // Predicated region
    $region10: #{tpu_custom_call.1} parent=1 // pred_check
      _
    $region11: #{tpu_custom_call.1} parent=1 // pred_check_branch
      %35 = sbr.rel (0) target = $region13
    $region12: #{tpu_custom_call.1} parent=1 // pred_region
      %36 = dma.done [#allocation3], 256
    $region13: #{tpu_custom_call.1} parent=1 // pred_fallthru
      _
    // Predicated region
    $region14: #{tpu_custom_call.1} parent=1 // pred_check
      _
    $region15: #{tpu_custom_call.1} parent=1 // pred_check_branch
      %38 = sbr.rel (0) target = $region17
    $region16: #{tpu_custom_call.1} parent=1 // pred_region
      %39 = dma.done [#allocation6], 256
    $region17: #{tpu_custom_call.1} parent=1 // pred_fallthru
      _
    %p40 = scmp.eq.s32.totalorder 0, 0
    // Predicated region
    $region18: #{tpu_custom_call.1} parent=1 // pred_check
      %p41 = pneg %p40
    $region19: #{tpu_custom_call.1} parent=1 // pred_check_branch
      %43 = sbr.rel (%p41) target = $region21
    $region20: #{tpu_custom_call.1} parent=1 // pred_region
      %44 = vst [vmem:[#allocation7] sm:$0xff] 0.0
    $region21: #{tpu_custom_call.1} parent=1 // pred_fallthru
      _
    %v45 = vld [vmem:[#allocation2] sm:$0xff]
    %v46 = vld [vmem:[#allocation2 + $0x8] sm:$0xff]
    %v47 = vld [vmem:[#allocation5] sm:$0xff]
    %v48 = vld [vmem:[#allocation5 + $0x8] sm:$0xff]
    %v49 = vadd.f32 %v45, 1.0
    %v50 = vlog2.pop %v49
    %v51 = vmul.f32 %v50, 0.6931472
    %v52 = vmul.f32 -0.5, %v45
    %v53 = vadd.f32 %v52, 1.0
    %v54 = vmul.f32 %v53, %v45
    %v55 = vand.u32 2147483647, %v45
    %vm56 = vcmp.lt.f32.partialorder %v55, 0.0004427343
    %v57 = vsel %vm56, %v54, %v51
    %v58 = vadd.f32 %v46, 1.0
    %v59 = vlog2.pop %v58
    %v60 = vmul.f32 %v59, 0.6931472
    %v61 = vmul.f32 -0.5, %v46
    %v62 = vadd.f32 %v61, 1.0
    %v63 = vmul.f32 %v62, %v46
    %v64 = vand.u32 2147483647, %v46
    %vm65 = vcmp.lt.f32.partialorder %v64, 0.0004427343
    %v66 = vsel %vm65, %v63, %v60
    %v67 = vadd.f32 %v47, 1.0
    %v68 = vlog2.pop %v67
    %v69 = vmul.f32 %v68, 0.6931472
    %v70 = vmul.f32 -0.5, %v47
    %v71 = vadd.f32 %v70, 1.0
    %v72 = vmul.f32 %v71, %v47
    %v73 = vand.u32 2147483647, %v47
    %vm74 = vcmp.lt.f32.partialorder %v73, 0.0004427343
    %v75 = vsel %vm74, %v72, %v69
    %v76 = vadd.f32 %v48, 1.0
    %v77 = vlog2.pop %v76
    %v78 = vmul.f32 %v77, 0.6931472
    %v79 = vmul.f32 -0.5, %v48
    %v80 = vadd.f32 %v79, 1.0
    %v81 = vmul.f32 %v80, %v48
    %v82 = vand.u32 2147483647, %v48
    %vm83 = vcmp.lt.f32.partialorder %v82, 0.0004427343
    %v84 = vsel %vm83, %v81, %v78
    %v85 = vsub.f32 %v57, %v75
    %v86 = vsub.f32 %v66, %v84
    %v87 = vmul.f32 %v85, %v85
    %v88 = vmul.f32 %v86, %v86
    %v89 = vadd.f32 %v87, %v88
    %v90 = vld [vmem:[#allocation7] sm:$0xff]
    %v91 = vadd.f32 %v90, %v89
    %92 = vst [vmem:[#allocation7] sm:$0xff] %v91
    // Predicated region
    $region22: #{tpu_custom_call.1} parent=1 // pred_check
      _
    $region23: #{tpu_custom_call.1} parent=1 // pred_check_branch
      %94 = sbr.rel (0) target = $region25
    $region24: #{tpu_custom_call.1} parent=1 // pred_region
      %s96 = ssub.s32 128, 128
      %97 = vsyncadd [#allocation4], %s96
      %s99 = sshll.u32 [#allocation7], 4
      %s100 = int_to_ptr.vmem [resolvable:$true] %s99
      %102 = dma.vmem_to_hbm [thread:$0]  %s100, 128, %s2, [#allocation4]
    $region25: #{tpu_custom_call.1} parent=1 // pred_fallthru
      _
    // Predicated region
    $region26: #{tpu_custom_call.1} parent=1 // pred_check
      _
    $region27: #{tpu_custom_call.1} parent=1 // pred_check_branch
      %104 = sbr.rel (0) target = $region29
    $region28: #{tpu_custom_call.1} parent=1 // pred_region
      %105 = dma.done [#allocation4], 128
    $region29: #{tpu_custom_call.1} parent=1 // pred_fallthru
      _
    %106 = vsyncpa [#allocation3], 1
    %107 = vsyncpa [#allocation6], 1
    %108 = vsyncpa [#allocation4], 1

</llo_original>
